<compile_context>
chip_gen: v5e
topology: v5e:2x2
jax: 0.10.0
libtpu: 0.0.40
codegen_flags: <defaults>
</compile_context>

<pallas_src>
import jax
import jax.numpy as jnp
from jax.experimental import pallas as pl
from jax.experimental.pallas import tpu as pltpu

H1, H2 = 200, 100  # logical hidden sizes from the torch module


def _round_up(x, m):
    return ((x + m - 1) // m) * m


def _pick_compute_dtype():
    """bf16 matmul inputs on v6e / v7x (bf16 VPU/EUP + native MXU path); f32 elsewhere."""
    try:
        kind = jax.devices()[0].device_kind.lower()
    except Exception:
        return jnp.float32
    if ("v6" in kind) or ("7" in kind):
        return jnp.bfloat16
    return jnp.float32


def mlp_kernel(x_ref, w1_ref, b1_ref, w2_ref, b2_ref, w3_ref, b3_ref, o_ref):
    wdt = w1_ref.dtype  # matmul input dtype (bf16 on v6e/v7x, f32 otherwise)

    # Layer 1: (TB, D_in_p) @ (D_in_p, H1_p) + (1, H1_p) -> sigmoid
    h1 = jnp.dot(x_ref[...], w1_ref[...], preferred_element_type=jnp.float32)
    h1 = jax.nn.sigmoid(h1 + b1_ref[...]).astype(wdt)

    # Layer 2: (TB, H1_p) @ (H1_p, H2_p) + (1, H2_p) -> sigmoid
    h2 = jnp.dot(h1, w2_ref[...], preferred_element_type=jnp.float32)
    h2 = jax.nn.sigmoid(h2 + b2_ref[...]).astype(wdt)

    # Layer 3: (TB, H2_p) @ (H2_p, D_out_p) + (1, D_out_p) -> sigmoid
    h3 = jnp.dot(h2, w3_ref[...], preferred_element_type=jnp.float32)
    o_ref[...] = jax.nn.sigmoid(h3 + b3_ref[...]).astype(o_ref.dtype)


def module_a_forward(x, w1, b1, w2, b2, w3, b3, *, block_b=256, compute_dtype=None):
    """x: (B, D_in) f32. w*: (in, out) f32 (pre-transposed vs torch). b*: (1, out) f32."""
    if compute_dtype is None:
        compute_dtype = _pick_compute_dtype()

    B, D_in = x.shape
    D_out = w3.shape[1]

    # ---- lane/sublane padding (done once, outside the kernel) ----
    D_in_p = _round_up(D_in, 128)
    H1_p = _round_up(H1, 128)      # 200 -> 256
    H2_p = _round_up(H2, 128)      # 100 -> 128
    D_out_p = _round_up(D_out, 128)

    TB = min(block_b, max(8, _round_up(B, 8)))
    B_p = _round_up(B, TB)

    pad2 = lambda a, r, c: jnp.pad(a, ((0, r - a.shape[0]), (0, c - a.shape[1])))

    x_p = pad2(x, B_p, D_in_p).astype(compute_dtype)
    # Zero-padding the extra ROWS of w2/w3 guarantees the sigmoid(0)=0.5 values
    # in the padded activation columns contribute nothing downstream.
    w1_p = pad2(w1, D_in_p, H1_p).astype(compute_dtype)
    w2_p = pad2(w2, H1_p, H2_p).astype(compute_dtype)
    w3_p = pad2(w3, H2_p, D_out_p).astype(compute_dtype)
    b1_p = pad2(b1, 1, H1_p)   # biases stay f32 (added to the f32 accumulator)
    b2_p = pad2(b2, 1, H2_p)
    b3_p = pad2(b3, 1, D_out_p)

    grid = (B_p // TB,)
    resident = lambda shape: pl.BlockSpec(shape, lambda i: (0, 0))

    itemsize = jnp.dtype(compute_dtype).itemsize
    cost = pl.CostEstimate(
        flops=2 * B_p * (D_in_p * H1_p + H1_p * H2_p + H2_p * D_out_p),
        transcendentals=B_p * (H1_p + H2_p + D_out_p),
        bytes_accessed=(
            (B_p * D_in_p + D_in_p * H1_p + H1_p * H2_p + H2_p * D_out_p) * itemsize
            + (H1_p + H2_p + D_out_p) * 4
            + B_p * D_out_p * 4
        ),
    )

    out_p = pl.pallas_call(
        mlp_kernel,
        out_shape=jax.ShapeDtypeStruct((B_p, D_out_p), jnp.float32),
        grid=grid,
        in_specs=[
            pl.BlockSpec((TB, D_in_p), lambda i: (i, 0)),   # x streams over batch
            resident((D_in_p, H1_p)),                        # weights/biases stay resident
            resident((1, H1_p)),
            resident((H1_p, H2_p)),
            resident((1, H2_p)),
            resident((H2_p, D_out_p)),
            resident((1, D_out_p)),
        ],
        out_specs=pl.BlockSpec((TB, D_out_p), lambda i: (i, 0)),
        compiler_params=pltpu.CompilerParams(
            dimension_semantics=("parallel",),  # shard batch grid across TCs on v7x
        ),
        cost_estimate=cost,
    )(x_p, w1_p, b1_p, w2_p, b2_p, w3_p, b3_p)

    return out_p[:B, :D_out]


def init_params(key, d_in, d_out):
    """Mirror ModuleA.__init__: weights ~ U(-30, 30), biases = 0."""
    k1, k2, k3 = jax.random.split(key, 3)
    # torch Linear weight is (out, in); we store (in, out) for x @ W.
    w1 = jax.random.uniform(k1, (d_in, H1), jnp.float32, -30.0, 30.0)
    w2 = jax.random.uniform(k2, (H1, H2), jnp.float32, -30.0, 30.0)
    w3 = jax.random.uniform(k3, (H2, d_out), jnp.float32, -30.0, 30.0)
    b1 = jnp.zeros((1, H1), jnp.float32)
    b2 = jnp.zeros((1, H2), jnp.float32)
    b3 = jnp.zeros((1, d_out), jnp.float32)
    return w1, b1, w2, b2, w3, b3


if __name__ == "__main__":
    B, D_in, D_out = 8, 32, 16
    key = jax.random.PRNGKey(0)
    kx, kp = jax.random.split(key)
    x = jax.random.normal(kx, (B, D_in), jnp.float32)
    w1, b1, w2, b2, w3, b3 = init_params(kp, D_in, D_out)

    cd = _pick_compute_dtype()
    out = module_a_forward(x, w1, b1, w2, b2, w3, b3, compute_dtype=cd)
    out = jax.block_until_ready(out)
    assert out.shape == (B, D_out)

    # Pure-JAX reference following the same dtype path (bf16 inputs, f32 accumulation).
    sig = jax.nn.sigmoid
    h1 = sig(jnp.dot(x.astype(cd), w1.astype(cd), preferred_element_type=jnp.float32) + b1)
    h2 = sig(jnp.dot(h1.astype(cd), w2.astype(cd), preferred_element_type=jnp.float32) + b2)
    ref = sig(jnp.dot(h2.astype(cd), w3.astype(cd), preferred_element_type=jnp.float32) + b3)
    tol = 1e-5 if cd == jnp.float32 else 2e-2
    assert jnp.allclose(out, ref, atol=tol, rtol=tol), float(jnp.max(jnp.abs(out - ref)))

    # Also sanity-check against the full-f32 reference (weights are deep in
    # sigmoid saturation, so bf16 stays very close).
    ref32 = sig(sig(sig(x @ w1 + b1) @ w2 + b2) @ w3 + b3)
    assert jnp.allclose(out, ref32, atol=5e-2, rtol=5e-2)

    print("KERNEL_OK")
</pallas_src>

<mosaic_0001>
module attributes {stable_mosaic.version = 11 : i64} {
  func.func @mlp_kernel(%arg0: i32, %arg1: memref<8x128xf32, #tpu.memory_space<vmem>>, %arg2: memref<128x256xf32, #tpu.memory_space<vmem>>, %arg3: memref<1x256xf32, #tpu.memory_space<vmem>>, %arg4: memref<256x128xf32, #tpu.memory_space<vmem>>, %arg5: memref<1x128xf32, #tpu.memory_space<vmem>>, %arg6: memref<128x128xf32, #tpu.memory_space<vmem>>, %arg7: memref<1x128xf32, #tpu.memory_space<vmem>>, %arg8: memref<8x128xf32, #tpu.memory_space<vmem>>) attributes {dimension_semantics = [#tpu.dimension_semantics<parallel>], iteration_bounds = array<i64: 1>, scalar_prefetch = 0 : i64, scratch_operands = 0 : i64, tpu.core_type = #tpu.core_type<tc>, window_params = [{transform_indices = @transform_0, window_bounds = array<i64: 8, 128>}, {pipeline_mode = #tpu.pipeline_mode<synchronous>, transform_indices = @transform_1, window_bounds = array<i64: 128, 256>}, {pipeline_mode = #tpu.pipeline_mode<synchronous>, transform_indices = @transform_2, window_bounds = array<i64: 1, 256>}, {pipeline_mode = #tpu.pipeline_mode<synchronous>, transform_indices = @transform_3, window_bounds = array<i64: 256, 128>}, {pipeline_mode = #tpu.pipeline_mode<synchronous>, transform_indices = @transform_4, window_bounds = array<i64: 1, 128>}, {pipeline_mode = #tpu.pipeline_mode<synchronous>, transform_indices = @transform_5, window_bounds = array<i64: 128, 128>}, {pipeline_mode = #tpu.pipeline_mode<synchronous>, transform_indices = @transform_6, window_bounds = array<i64: 1, 128>}, {transform_indices = @transform_7, window_bounds = array<i64: 8, 128>}]} {
    %c0 = arith.constant 0 : index
    %c0_0 = arith.constant 0 : index
    %0 = vector.load %arg1[%c0, %c0_0] : memref<8x128xf32, #tpu.memory_space<vmem>>, vector<8x128xf32>
    %c0_1 = arith.constant 0 : index
    %c0_2 = arith.constant 0 : index
    %1 = vector.load %arg2[%c0_1, %c0_2] : memref<128x256xf32, #tpu.memory_space<vmem>>, vector<128x256xf32>
    %cst = arith.constant dense<0.000000e+00> : vector<8x256xf32>
    %2 = tpu.matmul %0, %1, %cst {dimension_numbers = #tpu.dot_dimension_numbers<[1], [0], [0], [1], [0, 0, 1, 1], [], []>} : vector<8x128xf32>, vector<128x256xf32>, vector<8x256xf32> -> vector<8x256xf32>
    %c0_3 = arith.constant 0 : index
    %c0_4 = arith.constant 0 : index
    %3 = vector.load %arg3[%c0_3, %c0_4] : memref<1x256xf32, #tpu.memory_space<vmem>>, vector<1x256xf32>
    %4 = vector.broadcast %3 : vector<1x256xf32> to vector<8x256xf32>
    %5 = arith.addf %2, %4 : vector<8x256xf32>
    %6 = arith.negf %5 : vector<8x256xf32>
    %7 = math.exp %6 : vector<8x256xf32>
    %cst_5 = arith.constant 1.000000e+00 : f32
    %8 = vector.broadcast %cst_5 : f32 to vector<8x256xf32>
    %9 = arith.addf %8, %7 : vector<8x256xf32>
    %10 = arith.divf %8, %9 : vector<8x256xf32>
    %c0_6 = arith.constant 0 : index
    %c0_7 = arith.constant 0 : index
    %11 = vector.load %arg4[%c0_6, %c0_7] : memref<256x128xf32, #tpu.memory_space<vmem>>, vector<256x128xf32>
    %cst_8 = arith.constant dense<0.000000e+00> : vector<8x128xf32>
    %12 = tpu.matmul %10, %11, %cst_8 {dimension_numbers = #tpu.dot_dimension_numbers<[1], [0], [0], [1], [0, 0, 1, 1], [], []>} : vector<8x256xf32>, vector<256x128xf32>, vector<8x128xf32> -> vector<8x128xf32>
    %c0_9 = arith.constant 0 : index
    %c0_10 = arith.constant 0 : index
    %13 = vector.load %arg5[%c0_9, %c0_10] : memref<1x128xf32, #tpu.memory_space<vmem>>, vector<1x128xf32>
    %14 = vector.broadcast %13 : vector<1x128xf32> to vector<8x128xf32>
    %15 = arith.addf %12, %14 : vector<8x128xf32>
    %16 = arith.negf %15 : vector<8x128xf32>
    %17 = math.exp %16 : vector<8x128xf32>
    %cst_11 = arith.constant 1.000000e+00 : f32
    %18 = vector.broadcast %cst_11 : f32 to vector<8x128xf32>
    %19 = arith.addf %18, %17 : vector<8x128xf32>
    %20 = arith.divf %18, %19 : vector<8x128xf32>
    %c0_12 = arith.constant 0 : index
    %c0_13 = arith.constant 0 : index
    %21 = vector.load %arg6[%c0_12, %c0_13] : memref<128x128xf32, #tpu.memory_space<vmem>>, vector<128x128xf32>
    %cst_14 = arith.constant dense<0.000000e+00> : vector<8x128xf32>
    %22 = tpu.matmul %20, %21, %cst_14 {dimension_numbers = #tpu.dot_dimension_numbers<[1], [0], [0], [1], [0, 0, 1, 1], [], []>} : vector<8x128xf32>, vector<128x128xf32>, vector<8x128xf32> -> vector<8x128xf32>
    %c0_15 = arith.constant 0 : index
    %c0_16 = arith.constant 0 : index
    %23 = vector.load %arg7[%c0_15, %c0_16] : memref<1x128xf32, #tpu.memory_space<vmem>>, vector<1x128xf32>
    %24 = vector.broadcast %23 : vector<1x128xf32> to vector<8x128xf32>
    %25 = arith.addf %22, %24 : vector<8x128xf32>
    %26 = arith.negf %25 : vector<8x128xf32>
    %27 = math.exp %26 : vector<8x128xf32>
    %cst_17 = arith.constant 1.000000e+00 : f32
    %28 = vector.broadcast %cst_17 : f32 to vector<8x128xf32>
    %29 = arith.addf %28, %27 : vector<8x128xf32>
    %30 = arith.divf %28, %29 : vector<8x128xf32>
    %c0_18 = arith.constant 0 : index
    %c0_19 = arith.constant 0 : index
    %31 = vector.load %arg8[%c0_18, %c0_19] : memref<8x128xf32, #tpu.memory_space<vmem>>, vector<8x128xf32>
    tpu.vector_store %arg8[%c0_18, %c0_19], %30 {strides = array<i32>} : memref<8x128xf32, #tpu.memory_space<vmem>>, vector<8x128xf32>,
    return
  }
  func.func @transform_0(%arg0: i32) -> (i32, i32) {
    %c0_i32 = arith.constant 0 : i32
    %c0_i32_0 = arith.constant 0 : i32
    return %arg0, %c0_i32 : i32, i32
  }
  func.func @transform_1(%arg0: i32) -> (i32, i32) {
    %c0_i32 = arith.constant 0 : i32
    %c0_i32_0 = arith.constant 0 : i32
    %c0_i32_1 = arith.constant 0 : i32
    return %c0_i32, %c0_i32_0 : i32, i32
  }
  func.func @transform_2(%arg0: i32) -> (i32, i32) {
    %c0_i32 = arith.constant 0 : i32
    %c0_i32_0 = arith.constant 0 : i32
    %c0_i32_1 = arith.constant 0 : i32
    return %c0_i32, %c0_i32_0 : i32, i32
  }
  func.func @transform_3(%arg0: i32) -> (i32, i32) {
    %c0_i32 = arith.constant 0 : i32
    %c0_i32_0 = arith.constant 0 : i32
    %c0_i32_1 = arith.constant 0 : i32
    return %c0_i32, %c0_i32_0 : i32, i32
  }
  func.func @transform_4(%arg0: i32) -> (i32, i32) {
    %c0_i32 = arith.constant 0 : i32
    %c0_i32_0 = arith.constant 0 : i32
    %c0_i32_1 = arith.constant 0 : i32
    return %c0_i32, %c0_i32_0 : i32, i32
  }
  func.func @transform_5(%arg0: i32) -> (i32, i32) {
    %c0_i32 = arith.constant 0 : i32
    %c0_i32_0 = arith.constant 0 : i32
    %c0_i32_1 = arith.constant 0 : i32
    return %c0_i32, %c0_i32_0 : i32, i32
  }
  func.func @transform_6(%arg0: i32) -> (i32, i32) {
    %c0_i32 = arith.constant 0 : i32
    %c0_i32_0 = arith.constant 0 : i32
    %c0_i32_1 = arith.constant 0 : i32
    return %c0_i32, %c0_i32_0 : i32, i32
  }
  func.func @transform_7(%arg0: i32) -> (i32, i32) {
    %c0_i32 = arith.constant 0 : i32
    %c0_i32_0 = arith.constant 0 : i32
    return %arg0, %c0_i32 : i32, i32
  }
}

</mosaic_0001>

<llo_original>
// kernel: tpu_custom_call.1
$region0: #{tpu_custom_call.1}
  #allocation0 [shape = 'u32[]', space=smem, size = 0x4, offset = 0x4, fixed_abs, tag = 'smem constant byte address 0x4 - core index']
  #allocation1 [shape = 'u32[72,128]{1,0:T(1,128)}', space=vmem, size = 0x9000, scoped, tag = 'internal scratch']
  %s0 = inlined_call_operand.hbm [shape: f32[8,128], index: 0, kind: input, shape index: {}]
  %s1 = inlined_call_operand.hbm [shape: f32[128,256], index: 1, kind: input, shape index: {}]
  %s2 = inlined_call_operand.hbm [shape: f32[1,256], index: 2, kind: input, shape index: {}]
  %s3 = inlined_call_operand.hbm [shape: f32[256,128], index: 3, kind: input, shape index: {}]
  %s4 = inlined_call_operand.vmem [shape: f32[1,128], index: 4, kind: input, shape index: {}]
  %s5 = inlined_call_operand.hbm [shape: f32[128,128], index: 5, kind: input, shape index: {}]
  %s6 = inlined_call_operand.vmem [shape: f32[1,128], index: 6, kind: input, shape index: {}]
  %s7 = inlined_call_operand.hbm [shape: f32[8,128], index: 7, kind: output, shape index: {}]
  %s8 = sld [smem:[#allocation0]]
  $region58: #{tpu_custom_call.1} parent=0
    _
  %s10 = ssub.s32 1, %s8
  %s11 = scalar_select 0, %s10, %s8
  $region1: #{tpu_custom_call.1} parent=0
    #allocation2 [shape = 'u8[4096]{0}', space=vmem, size = 0x1000, scoped, tag = 'input window, operand 0, single buffered']
    #allocation3 [shape = 's32[1]{0}', space=sflag, size = 0x4, scoped, tag = 'scoped memory for tpu_custom_call.1']
    #allocation4 [shape = 's32[1]{0}', space=sflag, size = 0x4, scoped, tag = 'scoped memory for tpu_custom_call.1']
    #allocation5 [shape = 'u8[131072]{0}', space=vmem, size = 0x20000, scoped, tag = 'input window, operand 1, single buffered']
    #allocation6 [shape = 's32[1]{0}', space=sflag, size = 0x4, scoped, tag = 'scoped memory for tpu_custom_call.1']
    #allocation7 [shape = 'u8[1024]{0}', space=vmem, size = 0x400, scoped, tag = 'input window, operand 2, single buffered']
    #allocation8 [shape = 'u8[131072]{0}', space=vmem, size = 0x20000, scoped, tag = 'input window, operand 3, single buffered']
    #allocation9 [shape = 's32[1]{0}', space=sflag, size = 0x4, scoped, tag = 'scoped memory for tpu_custom_call.1']
    #allocation10 [shape = 'u8[65536]{0}', space=vmem, size = 0x10000, scoped, tag = 'input window, operand 5, single buffered']
    #allocation11 [shape = 'u8[4096]{0}', space=vmem, size = 0x1000, scoped, tag = 'output window, operand 0, single buffered']
    %12 = vsyncpa [#allocation3], 0
    %13 = vsyncpa [#allocation6], 0
    %14 = vsyncpa [#allocation9], 0
    %15 = vsyncpa [#allocation4], 0
    // Predicated region
    $region2: #{tpu_custom_call.1} parent=1 // pred_check
      _
    $region3: #{tpu_custom_call.1} parent=1 // pred_check_branch
      %17 = sbr.rel (0) target = $region5
    $region4: #{tpu_custom_call.1} parent=1 // pred_region
      %19 = vsyncadd [#allocation3], 0
      %s21 = sshll.u32 %s0, 4
      %s22 = int_to_ptr.hbm [resolvable:$true] %s21
      %s23 = sshll.u32 [#allocation2], 4
      %s24 = int_to_ptr.vmem [resolvable:$true] %s23
      %26 = dma.hbm_to_vmem [thread:$0]  %s22, 128, %s24, [#allocation3]
    $region5: #{tpu_custom_call.1} parent=1 // pred_fallthru
      _
    // Predicated region
    $region6: #{tpu_custom_call.1} parent=1 // pred_check
      _
    $region7: #{tpu_custom_call.1} parent=1 // pred_check_branch
      %28 = sbr.rel (0) target = $region9
    $region8: #{tpu_custom_call.1} parent=1 // pred_region
      %30 = vsyncadd [#allocation6], 0
      %s31 = sshll.u32 %s1, 4
      %s32 = int_to_ptr.hbm [resolvable:$true] %s31
      %s33 = sshll.u32 [#allocation5], 4
      %s34 = int_to_ptr.vmem [resolvable:$true] %s33
      %39 = dma.hbm_to_vmem [thread:$0]  %s32, 4096, %s34, [#allocation6], 256, 256, 16
    $region9: #{tpu_custom_call.1} parent=1 // pred_fallthru
      _
    // Predicated region
    $region10: #{tpu_custom_call.1} parent=1 // pred_check
      _
    $region11: #{tpu_custom_call.1} parent=1 // pred_check_branch
      %41 = sbr.rel (0) target = $region13
    $region12: #{tpu_custom_call.1} parent=1 // pred_region
      %43 = vsyncadd [#allocation6], 0
      %s45 = sshll.u32 %s2, 4
      %s46 = int_to_ptr.hbm [resolvable:$true] %s45
      %s47 = sshll.u32 [#allocation7], 4
      %s48 = int_to_ptr.vmem [resolvable:$true] %s47
      %50 = dma.hbm_to_vmem [thread:$0]  %s46, 32, %s48, [#allocation6]
    $region13: #{tpu_custom_call.1} parent=1 // pred_fallthru
      _
    // Predicated region
    $region14: #{tpu_custom_call.1} parent=1 // pred_check
      _
    $region15: #{tpu_custom_call.1} parent=1 // pred_check_branch
      %52 = sbr.rel (0) target = $region17
    $region16: #{tpu_custom_call.1} parent=1 // pred_region
      %54 = vsyncadd [#allocation9], 0
      %s55 = sshll.u32 %s3, 4
      %s56 = int_to_ptr.hbm [resolvable:$true] %s55
      %s57 = sshll.u32 [#allocation8], 4
      %s58 = int_to_ptr.vmem [resolvable:$true] %s57
      %63 = dma.hbm_to_vmem [thread:$0]  %s56, 4096, %s58, [#allocation9], 128, 128, 8
    $region17: #{tpu_custom_call.1} parent=1 // pred_fallthru
      _
    // Predicated region
    $region18: #{tpu_custom_call.1} parent=1 // pred_check
      _
    $region19: #{tpu_custom_call.1} parent=1 // pred_check_branch
      %65 = sbr.rel (0) target = $region21
    $region20: #{tpu_custom_call.1} parent=1 // pred_region
      _
    $region21: #{tpu_custom_call.1} parent=1 // pred_fallthru
      _
    // Predicated region
    $region22: #{tpu_custom_call.1} parent=1 // pred_check
      _
    $region23: #{tpu_custom_call.1} parent=1 // pred_check_branch
      %67 = sbr.rel (0) target = $region25
    $region24: #{tpu_custom_call.1} parent=1 // pred_region
      %69 = vsyncadd [#allocation9], 0
      %s70 = sshll.u32 %s5, 4
      %s71 = int_to_ptr.hbm [resolvable:$true] %s70
      %s72 = sshll.u32 [#allocation10], 4
      %s73 = int_to_ptr.vmem [resolvable:$true] %s72
      %78 = dma.hbm_to_vmem [thread:$0]  %s71, 2048, %s73, [#allocation9], 128, 128, 8
    $region25: #{tpu_custom_call.1} parent=1 // pred_fallthru
      _
    // Predicated region
    $region26: #{tpu_custom_call.1} parent=1 // pred_check
      _
    $region27: #{tpu_custom_call.1} parent=1 // pred_check_branch
      %80 = sbr.rel (0) target = $region29
    $region28: #{tpu_custom_call.1} parent=1 // pred_region
      _
    $region29: #{tpu_custom_call.1} parent=1 // pred_fallthru
      _
    // Predicated region
    $region30: #{tpu_custom_call.1} parent=1 // pred_check
      _
    $region31: #{tpu_custom_call.1} parent=1 // pred_check_branch
      %82 = sbr.rel (0) target = $region33
    $region32: #{tpu_custom_call.1} parent=1 // pred_region
      %84 = dma.done [#allocation3], 128
    $region33: #{tpu_custom_call.1} parent=1 // pred_fallthru
      _
    // Predicated region
    $region34: #{tpu_custom_call.1} parent=1 // pred_check
      _
    $region35: #{tpu_custom_call.1} parent=1 // pred_check_branch
      %86 = sbr.rel (0) target = $region37
    $region36: #{tpu_custom_call.1} parent=1 // pred_region
      %88 = dma.done [#allocation6], 4096
    $region37: #{tpu_custom_call.1} parent=1 // pred_fallthru
      _
    // Predicated region
    $region38: #{tpu_custom_call.1} parent=1 // pred_check
      _
    $region39: #{tpu_custom_call.1} parent=1 // pred_check_branch
      %90 = sbr.rel (0) target = $region41
    $region40: #{tpu_custom_call.1} parent=1 // pred_region
      %92 = dma.done [#allocation6], 32
    $region41: #{tpu_custom_call.1} parent=1 // pred_fallthru
      _
    // Predicated region
    $region42: #{tpu_custom_call.1} parent=1 // pred_check
      _
    $region43: #{tpu_custom_call.1} parent=1 // pred_check_branch
      %94 = sbr.rel (0) target = $region45
    $region44: #{tpu_custom_call.1} parent=1 // pred_region
      %96 = dma.done [#allocation9], 4096
    $region45: #{tpu_custom_call.1} parent=1 // pred_fallthru
      _
    // Predicated region
    $region46: #{tpu_custom_call.1} parent=1 // pred_check
      _
    $region47: #{tpu_custom_call.1} parent=1 // pred_check_branch
      %98 = sbr.rel (0) target = $region49
    $region48: #{tpu_custom_call.1} parent=1 // pred_region
      %100 = dma.done [#allocation9], 2048
    $region49: #{tpu_custom_call.1} parent=1 // pred_fallthru
      _
    %v101 = vld [vmem:[#allocation2] sm:$0xff]
    %v102 = vld [vmem:[#allocation5] sm:$0xff]
    %v103 = vld [vmem:[#allocation5 + $0x8] sm:$0xff]
    %v104 = vld [vmem:[#allocation5 + $0x10] sm:$0xff]
    %v105 = vld [vmem:[#allocation5 + $0x18] sm:$0xff]
    %v106 = vld [vmem:[#allocation5 + $0x20] sm:$0xff]
    %v107 = vld [vmem:[#allocation5 + $0x28] sm:$0xff]
    %v108 = vld [vmem:[#allocation5 + $0x30] sm:$0xff]
    %v109 = vld [vmem:[#allocation5 + $0x38] sm:$0xff]
    %v110 = vld [vmem:[#allocation5 + $0x40] sm:$0xff]
    %v111 = vld [vmem:[#allocation5 + $0x48] sm:$0xff]
    %v112 = vld [vmem:[#allocation5 + $0x50] sm:$0xff]
    %v113 = vld [vmem:[#allocation5 + $0x58] sm:$0xff]
    %v114 = vld [vmem:[#allocation5 + $0x60] sm:$0xff]
    %v115 = vld [vmem:[#allocation5 + $0x68] sm:$0xff]
    %v116 = vld [vmem:[#allocation5 + $0x70] sm:$0xff]
    %v117 = vld [vmem:[#allocation5 + $0x78] sm:$0xff]
    %v118 = vld [vmem:[#allocation5 + $0x80] sm:$0xff]
    %v119 = vld [vmem:[#allocation5 + $0x88] sm:$0xff]
    %v120 = vld [vmem:[#allocation5 + $0x90] sm:$0xff]
    %v121 = vld [vmem:[#allocation5 + $0x98] sm:$0xff]
    %v122 = vld [vmem:[#allocation5 + $0xa0] sm:$0xff]
    %v123 = vld [vmem:[#allocation5 + $0xa8] sm:$0xff]
    %v124 = vld [vmem:[#allocation5 + $0xb0] sm:$0xff]
    %v125 = vld [vmem:[#allocation5 + $0xb8] sm:$0xff]
    %v126 = vld [vmem:[#allocation5 + $0xc0] sm:$0xff]
    %v127 = vld [vmem:[#allocation5 + $0xc8] sm:$0xff]
    %v128 = vld [vmem:[#allocation5 + $0xd0] sm:$0xff]
    %v129 = vld [vmem:[#allocation5 + $0xd8] sm:$0xff]
    %v130 = vld [vmem:[#allocation5 + $0xe0] sm:$0xff]
    %v131 = vld [vmem:[#allocation5 + $0xe8] sm:$0xff]
    %v132 = vld [vmem:[#allocation5 + $0xf0] sm:$0xff]
    %v133 = vld [vmem:[#allocation5 + $0xf8] sm:$0xff]
    %v134 = vld [vmem:[#allocation7] sm:$0x3]
    %v136 = vperm.slane %v134, 0
    %v137 = vperm.slane %v134, 1
    %140 = vmatpush.msra.mxu0 %v132
    %141 = vmatpush.msra.mxu0 %v130
    %142 = vmatpush.msra.mxu0 %v128
    %143 = vmatpush.msra.mxu0 %v126
    %144 = vmatpush.msra.mxu0 %v124
    %145 = vmatpush.msra.mxu0 %v122
    %146 = vmatpush.msra.mxu0 %v120
    %147 = vmatpush.msra.mxu0 %v118
    %148 = vmatpush.msra.mxu0 %v116
    %149 = vmatpush.msra.mxu0 %v114
    %150 = vmatpush.msra.mxu0 %v112
    %151 = vmatpush.msra.mxu0 %v110
    %152 = vmatpush.msra.mxu0 %v108
    %153 = vmatpush.msra.mxu0 %v106
    %154 = vmatpush.msra.mxu0 %v104
    %155 = vmatpush.msra.mxu0 %v102
    %156 = vmatmul.f32.gmra.mxu0 %v101
    %v157 = vpop.f32.mrf.mxu0
    %v158 = vadd.f32 %v136, %v157
    %159 = vdwg.mxu0
    %160 = vmatpush.msra.mxu0 %v133
    %161 = vmatpush.msra.mxu0 %v131
    %162 = vmatpush.msra.mxu0 %v129
    %163 = vmatpush.msra.mxu0 %v127
    %164 = vmatpush.msra.mxu0 %v125
    %165 = vmatpush.msra.mxu0 %v123
    %166 = vmatpush.msra.mxu0 %v121
    %167 = vmatpush.msra.mxu0 %v119
    %168 = vmatpush.msra.mxu0 %v117
    %169 = vmatpush.msra.mxu0 %v115
    %170 = vmatpush.msra.mxu0 %v113
    %171 = vmatpush.msra.mxu0 %v111
    %172 = vmatpush.msra.mxu0 %v109
    %173 = vmatpush.msra.mxu0 %v107
    %174 = vmatpush.msra.mxu0 %v105
    %175 = vmatpush.msra.mxu0 %v103
    %176 = vmatmul.f32.gmra.mxu0 %v101
    %v177 = vpop.f32.mrf.mxu0
    %v178 = vadd.f32 %v137, %v177
    %179 = vdwg.mxu0
    %v180 = vxor.u32 %v158, 2147483648
    %v181 = vxor.u32 %v178, 2147483648
    %v182 = vmul.f32 %v180, 1.442695
    %v183 = vpow.pop %v182
    %v184 = vmul.f32 %v181, 1.442695
    %v185 = vpow.pop %v184
    %v186 = vadd.f32 %v183, 1.0
    %v187 = vadd.f32 %v185, 1.0
    %v188 = vrcp.pop %v186
    %v189 = vmul.f32 %v186, %v188
    %v190 = vsub.f32 1.0, %v189
    %v191 = vmul.f32 %v188, %v190
    %v192 = vadd.f32 %v188, %v191
    %vm193 = vweird.f32 %v186
    %vm194 = vweird.f32 %v188
    %vm195 = vmor %vm193, %vm194
    %v196 = vsel %vm195, %v188, %v192
    %v197 = vand.u32 2147483647, %v186
    %vm198 = vcmp.eq.f32.partialorder %v197, 8.507059e+37
    %v199 = vand.u32 %v186, 2147483648
    %v200 = vor.u32 1.1754944e-38, %v199
    %v201 = vsel %vm198, %v200, %v196
    %v202 = vmul.f32 1.0, %v201
    %v203 = vrcp.pop %v187
    %v204 = vmul.f32 %v187, %v203
    %v205 = vsub.f32 1.0, %v204
    %v206 = vmul.f32 %v203, %v205
    %v207 = vadd.f32 %v203, %v206
    %vm208 = vweird.f32 %v187
    %vm209 = vweird.f32 %v203
    %vm210 = vmor %vm208, %vm209
    %v211 = vsel %vm210, %v203, %v207
    %v212 = vand.u32 2147483647, %v187
    %vm213 = vcmp.eq.f32.partialorder %v212, 8.507059e+37
    %v214 = vand.u32 %v187, 2147483648
    %v215 = vor.u32 1.1754944e-38, %v214
    %v216 = vsel %vm213, %v215, %v211
    %v217 = vmul.f32 1.0, %v216
    %v218 = vld [vmem:[#allocation8] sm:$0xff]
    %v219 = vld [vmem:[#allocation8 + $0x8] sm:$0xff]
    %v220 = vld [vmem:[#allocation8 + $0x10] sm:$0xff]
    %v221 = vld [vmem:[#allocation8 + $0x18] sm:$0xff]
    %v222 = vld [vmem:[#allocation8 + $0x20] sm:$0xff]
    %v223 = vld [vmem:[#allocation8 + $0x28] sm:$0xff]
    %v224 = vld [vmem:[#allocation8 + $0x30] sm:$0xff]
    %v225 = vld [vmem:[#allocation8 + $0x38] sm:$0xff]
    %v226 = vld [vmem:[#allocation8 + $0x40] sm:$0xff]
    %v227 = vld [vmem:[#allocation8 + $0x48] sm:$0xff]
    %v228 = vld [vmem:[#allocation8 + $0x50] sm:$0xff]
    %v229 = vld [vmem:[#allocation8 + $0x58] sm:$0xff]
    %v230 = vld [vmem:[#allocation8 + $0x60] sm:$0xff]
    %v231 = vld [vmem:[#allocation8 + $0x68] sm:$0xff]
    %v232 = vld [vmem:[#allocation8 + $0x70] sm:$0xff]
    %v233 = vld [vmem:[#allocation8 + $0x78] sm:$0xff]
    %v234 = vld [vmem:[#allocation8 + $0x80] sm:$0xff]
    %v235 = vld [vmem:[#allocation8 + $0x88] sm:$0xff]
    %v236 = vld [vmem:[#allocation8 + $0x90] sm:$0xff]
    %v237 = vld [vmem:[#allocation8 + $0x98] sm:$0xff]
    %v238 = vld [vmem:[#allocation8 + $0xa0] sm:$0xff]
    %v239 = vld [vmem:[#allocation8 + $0xa8] sm:$0xff]
    %v240 = vld [vmem:[#allocation8 + $0xb0] sm:$0xff]
    %v241 = vld [vmem:[#allocation8 + $0xb8] sm:$0xff]
    %v242 = vld [vmem:[#allocation8 + $0xc0] sm:$0xff]
    %v243 = vld [vmem:[#allocation8 + $0xc8] sm:$0xff]
    %v244 = vld [vmem:[#allocation8 + $0xd0] sm:$0xff]
    %v245 = vld [vmem:[#allocation8 + $0xd8] sm:$0xff]
    %v246 = vld [vmem:[#allocation8 + $0xe0] sm:$0xff]
    %v247 = vld [vmem:[#allocation8 + $0xe8] sm:$0xff]
    %v248 = vld [vmem:[#allocation8 + $0xf0] sm:$0xff]
    %v249 = vld [vmem:[#allocation8 + $0xf8] sm:$0xff]
    %v250 = vld [vmem:[%s4] sm:$0x1]
    %v252 = vperm.slane %v250, 0
    %254 = vmatpush.msra.mxu0 %v233
    %255 = vmatpush.msra.mxu0 %v232
    %256 = vmatpush.msra.mxu0 %v231
    %257 = vmatpush.msra.mxu0 %v230
    %258 = vmatpush.msra.mxu0 %v229
    %259 = vmatpush.msra.mxu0 %v228
    %260 = vmatpush.msra.mxu0 %v227
    %261 = vmatpush.msra.mxu0 %v226
    %262 = vmatpush.msra.mxu0 %v225
    %263 = vmatpush.msra.mxu0 %v224
    %264 = vmatpush.msra.mxu0 %v223
    %265 = vmatpush.msra.mxu0 %v222
    %266 = vmatpush.msra.mxu0 %v221
    %267 = vmatpush.msra.mxu0 %v220
    %268 = vmatpush.msra.mxu0 %v219
    %269 = vmatpush.msra.mxu0 %v218
    %270 = vmatmul.f32.gmra.mxu0 %v202
    %v271 = vpop.f32.mrf.mxu0
    %v272 = vadd.f32 %v252, %v271
    %273 = vdwg.mxu0
    %274 = vmatpush.msra.mxu0 %v249
    %275 = vmatpush.msra.mxu0 %v248
    %276 = vmatpush.msra.mxu0 %v247
    %277 = vmatpush.msra.mxu0 %v246
    %278 = vmatpush.msra.mxu0 %v245
    %279 = vmatpush.msra.mxu0 %v244
    %280 = vmatpush.msra.mxu0 %v243
    %281 = vmatpush.msra.mxu0 %v242
    %282 = vmatpush.msra.mxu0 %v241
    %283 = vmatpush.msra.mxu0 %v240
    %284 = vmatpush.msra.mxu0 %v239
    %285 = vmatpush.msra.mxu0 %v238
    %286 = vmatpush.msra.mxu0 %v237
    %287 = vmatpush.msra.mxu0 %v236
    %288 = vmatpush.msra.mxu0 %v235
    %289 = vmatpush.msra.mxu0 %v234
    %290 = vmatmul.f32.gmra.mxu0 %v217
    %v291 = vpop.f32.mrf.mxu0
    %v292 = vadd.f32 %v272, %v291
    %293 = vdwg.mxu0
    %v294 = vxor.u32 %v292, 2147483648
    %v295 = vmul.f32 %v294, 1.442695
    %v296 = vpow.pop %v295
    %v297 = vadd.f32 %v296, 1.0
    %v298 = vrcp.pop %v297
    %v299 = vmul.f32 %v297, %v298
    %v300 = vsub.f32 1.0, %v299
    %v301 = vmul.f32 %v298, %v300
    %v302 = vadd.f32 %v298, %v301
    %vm303 = vweird.f32 %v297
    %vm304 = vweird.f32 %v298
    %vm305 = vmor %vm303, %vm304
    %v306 = vsel %vm305, %v298, %v302
    %v307 = vand.u32 2147483647, %v297
    %vm308 = vcmp.eq.f32.partialorder %v307, 8.507059e+37
    %v309 = vand.u32 %v297, 2147483648
    %v310 = vor.u32 1.1754944e-38, %v309
    %v311 = vsel %vm308, %v310, %v306
    %v312 = vmul.f32 1.0, %v311
    %v313 = vld [vmem:[#allocation10] sm:$0xff]
    %v314 = vld [vmem:[#allocation10 + $0x8] sm:$0xff]
    %v315 = vld [vmem:[#allocation10 + $0x10] sm:$0xff]
    %v316 = vld [vmem:[#allocation10 + $0x18] sm:$0xff]
    %v317 = vld [vmem:[#allocation10 + $0x20] sm:$0xff]
    %v318 = vld [vmem:[#allocation10 + $0x28] sm:$0xff]
    %v319 = vld [vmem:[#allocation10 + $0x30] sm:$0xff]
    %v320 = vld [vmem:[#allocation10 + $0x38] sm:$0xff]
    %v321 = vld [vmem:[#allocation10 + $0x40] sm:$0xff]
    %v322 = vld [vmem:[#allocation10 + $0x48] sm:$0xff]
    %v323 = vld [vmem:[#allocation10 + $0x50] sm:$0xff]
    %v324 = vld [vmem:[#allocation10 + $0x58] sm:$0xff]
    %v325 = vld [vmem:[#allocation10 + $0x60] sm:$0xff]
    %v326 = vld [vmem:[#allocation10 + $0x68] sm:$0xff]
    %v327 = vld [vmem:[#allocation10 + $0x70] sm:$0xff]
    %v328 = vld [vmem:[#allocation10 + $0x78] sm:$0xff]
    %v329 = vld [vmem:[%s6] sm:$0x1]
    %v331 = vperm.slane %v329, 0
    %333 = vmatpush.msra.mxu0 %v328
    %334 = vmatpush.msra.mxu0 %v327
    %335 = vmatpush.msra.mxu0 %v326
    %336 = vmatpush.msra.mxu0 %v325
    %337 = vmatpush.msra.mxu0 %v324
    %338 = vmatpush.msra.mxu0 %v323
    %339 = vmatpush.msra.mxu0 %v322
    %340 = vmatpush.msra.mxu0 %v321
    %341 = vmatpush.msra.mxu0 %v320
    %342 = vmatpush.msra.mxu0 %v319
    %343 = vmatpush.msra.mxu0 %v318
    %344 = vmatpush.msra.mxu0 %v317
    %345 = vmatpush.msra.mxu0 %v316
    %346 = vmatpush.msra.mxu0 %v315
    %347 = vmatpush.msra.mxu0 %v314
    %348 = vmatpush.msra.mxu0 %v313
    %349 = vmatmul.f32.gmra.mxu0 %v312
    %v350 = vpop.f32.mrf.mxu0
    %v351 = vadd.f32 %v331, %v350
    %352 = vdwg.mxu0
    %v353 = vxor.u32 %v351, 2147483648
    %v354 = vmul.f32 %v353, 1.442695
    %v355 = vpow.pop %v354
    %v356 = vadd.f32 %v355, 1.0
    %v357 = vrcp.pop %v356
    %v358 = vmul.f32 %v356, %v357
    %v359 = vsub.f32 1.0, %v358
    %v360 = vmul.f32 %v357, %v359
    %v361 = vadd.f32 %v357, %v360
    %vm362 = vweird.f32 %v356
    %vm363 = vweird.f32 %v357
    %vm364 = vmor %vm362, %vm363
    %v365 = vsel %vm364, %v357, %v361
    %v366 = vand.u32 2147483647, %v356
    %vm367 = vcmp.eq.f32.partialorder %v366, 8.507059e+37
    %v368 = vand.u32 %v356, 2147483648
    %v369 = vor.u32 1.1754944e-38, %v368
    %v370 = vsel %vm367, %v369, %v365
    %v371 = vmul.f32 1.0, %v370
    %372 = vst [vmem:[#allocation11] sm:$0xff] %v371
    // Predicated region
    $region50: #{tpu_custom_call.1} parent=1 // pred_check
      _
    $region51: #{tpu_custom_call.1} parent=1 // pred_check_branch
      %374 = sbr.rel (0) target = $region53
    $region52: #{tpu_custom_call.1} parent=1 // pred_region
      %376 = vsyncadd [#allocation4], 0
      %s378 = sshll.u32 [#allocation11], 4
      %s379 = int_to_ptr.vmem [resolvable:$true] %s378
      %s380 = sshll.u32 %s7, 4
      %s381 = int_to_ptr.hbm [resolvable:$true] %s380
      %383 = dma.vmem_to_hbm [thread:$0]  %s379, 128, %s381, [#allocation4]
    $region53: #{tpu_custom_call.1} parent=1 // pred_fallthru
      _
    // Predicated region
    $region54: #{tpu_custom_call.1} parent=1 // pred_check
      _
    $region55: #{tpu_custom_call.1} parent=1 // pred_check_branch
      %385 = sbr.rel (0) target = $region57
    $region56: #{tpu_custom_call.1} parent=1 // pred_region
      %387 = dma.done [#allocation4], 128
    $region57: #{tpu_custom_call.1} parent=1 // pred_fallthru
      _
    %388 = vsyncpa [#allocation3], 1
    %389 = vsyncpa [#allocation6], 1
    %390 = vsyncpa [#allocation9], 1
    %391 = vsyncpa [#allocation4], 1

</llo_original>
